<compile_context>
chip_gen: v7x
topology: tpu7x:2x2x1
jax: 0.10.0
libtpu: 0.0.40
codegen_flags: <defaults>
</compile_context>

<pallas_src>
import functools

import jax
import jax.numpy as jnp
from jax import lax
from jax.experimental import pallas as pl
from jax.experimental.pallas import tpu as pltpu


def _rnn_kernel(text_ref, xtab_ref, whh_ref, wfc_ref, bfc_ref, out_ref, *,
                seq_len, batch, hidden_dim):
    """Refs:
       text_ref : SMEM [seq, batch] int32 token ids
       xtab_ref : VMEM [vocab, hidden]   = emb @ W_ih^T + (b_ih + b_hh)
       whh_ref  : VMEM [hidden, hidden]  = W_hh^T
       wfc_ref  : VMEM [hidden, out_pad] = W_fc^T zero-padded to 128 lanes
       bfc_ref  : VMEM [1, out_pad]      = b_fc zero-padded
       out_ref  : VMEM [batch, out_pad]
    """

    def step(t, h):
        # Gather this timestep's pre-projected inputs row-by-row from the
        # VMEM-resident table using token ids read from SMEM.
        rows = [xtab_ref[pl.ds(text_ref[t, b], 1), :] for b in range(batch)]
        x_t = rows[0] if batch == 1 else jnp.concatenate(rows, axis=0)
        pre = x_t + jnp.dot(h, whh_ref[...], preferred_element_type=jnp.float32)
        return jnp.tanh(pre)

    h0 = jnp.zeros((batch, hidden_dim), jnp.float32)
    h = lax.fori_loop(0, seq_len, step, h0, unroll=True)

    # TODO(synk): nn.Dropout on the hidden state is identity in eval mode;
    # training-mode dropout is not implemented here.
    out_ref[...] = (
        jnp.dot(h, wfc_ref[...], preferred_element_type=jnp.float32)
        + bfc_ref[...]
    ).astype(out_ref.dtype)


def rnn_pallas(text, emb_table, w_ih, w_hh, b_ih, b_hh, w_fc, b_fc):
    """Forward pass equivalent to the PyTorch RNN module (eval mode).

    text:      [seq, batch] int32
    emb_table: [vocab, emb_dim]  f32   (embedding.weight)
    w_ih:      [hidden, emb_dim] f32   (rnn.weight_ih_l0)
    w_hh:      [hidden, hidden]  f32   (rnn.weight_hh_l0)
    b_ih/b_hh: [hidden]          f32   (rnn.bias_ih_l0 / rnn.bias_hh_l0)
    w_fc:      [out, hidden]     f32   (fc.weight)
    b_fc:      [out]             f32   (fc.bias)
    returns:   [batch, out]      f32
    """
    seq_len, batch = text.shape
    hidden_dim = w_hh.shape[0]
    out_dim = w_fc.shape[0]

    # Exact fold (no nonlinearity between embedding and the input projection).
    x_table = emb_table @ w_ih.T + (b_ih + b_hh)[None, :]     # [vocab, hidden]
    w_hh_t = w_hh.T                                           # [hidden, hidden]

    # Lane-dense head: pad fc output dim up to a multiple of 128.
    out_pad = pl.cdiv(out_dim, 128) * 128
    w_fc_t = jnp.zeros((hidden_dim, out_pad), jnp.float32).at[:, :out_dim].set(w_fc.T)
    b_fc_p = jnp.zeros((1, out_pad), jnp.float32).at[:, :out_dim].set(b_fc[None, :])

    kernel = functools.partial(
        _rnn_kernel, seq_len=seq_len, batch=batch, hidden_dim=hidden_dim)

    out = pl.pallas_call(
        kernel,
        out_shape=jax.ShapeDtypeStruct((batch, out_pad), jnp.float32),
        in_specs=[
            pl.BlockSpec(memory_space=pltpu.MemorySpace.SMEM),  # text (token ids)
            pl.BlockSpec(memory_space=pltpu.MemorySpace.VMEM),  # folded emb table
            pl.BlockSpec(memory_space=pltpu.MemorySpace.VMEM),  # W_hh^T
            pl.BlockSpec(memory_space=pltpu.MemorySpace.VMEM),  # W_fc^T (padded)
            pl.BlockSpec(memory_space=pltpu.MemorySpace.VMEM),  # b_fc   (padded)
        ],
        out_specs=pl.BlockSpec(memory_space=pltpu.MemorySpace.VMEM),
    )(text.astype(jnp.int32), x_table, w_hh_t, w_fc_t, b_fc_p)

    return out[:, :out_dim]


def rnn_reference(text, emb_table, w_ih, w_hh, b_ih, b_hh, w_fc, b_fc):
    """Straightforward pure-JAX replica of the PyTorch forward (eval mode)."""
    x = jnp.take(emb_table, text, axis=0)            # [seq, batch, emb]
    seq_len, batch = text.shape
    h = jnp.zeros((batch, w_hh.shape[0]), jnp.float32)
    for t in range(seq_len):
        h = jnp.tanh(x[t] @ w_ih.T + b_ih + h @ w_hh.T + b_hh)
    return h @ w_fc.T + b_fc


if __name__ == "__main__":
    # Module hyperparameters (small, deterministic).
    input_dim = 100       # vocab size
    embedding_dim = 32
    hidden_dim = 32
    output_dim = 8

    seq_len = 8
    batch = 2

    key = jax.random.PRNGKey(0)
    keys = jax.random.split(key, 8)

    text = jax.random.randint(keys[0], (seq_len, batch), 0, input_dim, dtype=jnp.int32)
    emb_table = jax.random.normal(keys[1], (input_dim, embedding_dim), jnp.float32) * 0.1
    w_ih = jax.random.normal(keys[2], (hidden_dim, embedding_dim), jnp.float32) * 0.2
    w_hh = jax.random.normal(keys[3], (hidden_dim, hidden_dim), jnp.float32) * 0.2
    b_ih = jax.random.normal(keys[4], (hidden_dim,), jnp.float32) * 0.05
    b_hh = jax.random.normal(keys[5], (hidden_dim,), jnp.float32) * 0.05
    w_fc = jax.random.normal(keys[6], (output_dim, hidden_dim), jnp.float32) * 0.2
    b_fc = jax.random.normal(keys[7], (output_dim,), jnp.float32) * 0.05

    out = rnn_pallas(text, emb_table, w_ih, w_hh, b_ih, b_hh, w_fc, b_fc)
    out = jax.block_until_ready(out)

    ref = rnn_reference(text, emb_table, w_ih, w_hh, b_ih, b_hh, w_fc, b_fc)
    assert out.shape == (batch, output_dim)
    assert jnp.allclose(out, ref, atol=1e-3, rtol=1e-3), "mismatch vs reference"

    print("KERNEL_OK")
</pallas_src>

<mosaic_0001>
module attributes {stable_mosaic.version = 11 : i64} {
  func.func @_rnn_kernel(%arg0: memref<8x2xi32, #tpu.memory_space<smem>>, %arg1: memref<100x32xf32, #tpu.memory_space<vmem>>, %arg2: memref<32x32xf32, #tpu.memory_space<vmem>>, %arg3: memref<32x128xf32, #tpu.memory_space<vmem>>, %arg4: memref<1x128xf32, #tpu.memory_space<vmem>>, %arg5: memref<2x128xf32, #tpu.memory_space<vmem>>) attributes {dimension_semantics = [], scalar_prefetch = 0 : i64, scratch_operands = 0 : i64, tpu.core_type = #tpu.core_type<tc>} {
    %cst = arith.constant 0.000000e+00 : f32
    %0 = vector.broadcast %cst : f32 to vector<2x32xf32>
    %c0_i32 = arith.constant 0 : i32
    %1 = arith.index_cast %c0_i32 : i32 to index
    %c0 = arith.constant 0 : index
    %2 = memref.load %arg0[%1, %c0] : memref<8x2xi32, #tpu.memory_space<smem>>
    %3 = arith.index_cast %2 : i32 to index
    %c0_0 = arith.constant 0 : index
    %4 = vector.load %arg1[%3, %c0_0] : memref<100x32xf32, #tpu.memory_space<vmem>>, vector<1x32xf32>
    %5 = arith.index_cast %c0_i32 : i32 to index
    %c1 = arith.constant 1 : index
    %6 = memref.load %arg0[%5, %c1] : memref<8x2xi32, #tpu.memory_space<smem>>
    %7 = arith.index_cast %6 : i32 to index
    %c0_1 = arith.constant 0 : index
    %8 = vector.load %arg1[%7, %c0_1] : memref<100x32xf32, #tpu.memory_space<vmem>>, vector<1x32xf32>
    %9 = tpu.concatenate %4, %8 in 0 : vector<1x32xf32>, vector<1x32xf32> -> vector<2x32xf32>
    %c0_2 = arith.constant 0 : index
    %c0_3 = arith.constant 0 : index
    %10 = vector.load %arg2[%c0_2, %c0_3] : memref<32x32xf32, #tpu.memory_space<vmem>>, vector<32x32xf32>
    %cst_4 = arith.constant dense<0.000000e+00> : vector<2x32xf32>
    %11 = tpu.matmul %0, %10, %cst_4 {dimension_numbers = #tpu.dot_dimension_numbers<[1], [0], [0], [1], [0, 0, 1, 1], [], []>} : vector<2x32xf32>, vector<32x32xf32>, vector<2x32xf32> -> vector<2x32xf32>
    %12 = arith.addf %9, %11 : vector<2x32xf32>
    %13 = math.tanh %12 : vector<2x32xf32>
    %c1_i32 = arith.constant 1 : i32
    %14 = arith.index_cast %c1_i32 : i32 to index
    %c0_5 = arith.constant 0 : index
    %15 = memref.load %arg0[%14, %c0_5] : memref<8x2xi32, #tpu.memory_space<smem>>
    %16 = arith.index_cast %15 : i32 to index
    %c0_6 = arith.constant 0 : index
    %17 = vector.load %arg1[%16, %c0_6] : memref<100x32xf32, #tpu.memory_space<vmem>>, vector<1x32xf32>
    %18 = arith.index_cast %c1_i32 : i32 to index
    %c1_7 = arith.constant 1 : index
    %19 = memref.load %arg0[%18, %c1_7] : memref<8x2xi32, #tpu.memory_space<smem>>
    %20 = arith.index_cast %19 : i32 to index
    %c0_8 = arith.constant 0 : index
    %21 = vector.load %arg1[%20, %c0_8] : memref<100x32xf32, #tpu.memory_space<vmem>>, vector<1x32xf32>
    %22 = tpu.concatenate %17, %21 in 0 : vector<1x32xf32>, vector<1x32xf32> -> vector<2x32xf32>
    %c0_9 = arith.constant 0 : index
    %c0_10 = arith.constant 0 : index
    %23 = vector.load %arg2[%c0_9, %c0_10] : memref<32x32xf32, #tpu.memory_space<vmem>>, vector<32x32xf32>
    %cst_11 = arith.constant dense<0.000000e+00> : vector<2x32xf32>
    %24 = tpu.matmul %13, %23, %cst_11 {dimension_numbers = #tpu.dot_dimension_numbers<[1], [0], [0], [1], [0, 0, 1, 1], [], []>} : vector<2x32xf32>, vector<32x32xf32>, vector<2x32xf32> -> vector<2x32xf32>
    %25 = arith.addf %22, %24 : vector<2x32xf32>
    %26 = math.tanh %25 : vector<2x32xf32>
    %c2_i32 = arith.constant 2 : i32
    %27 = arith.index_cast %c2_i32 : i32 to index
    %c0_12 = arith.constant 0 : index
    %28 = memref.load %arg0[%27, %c0_12] : memref<8x2xi32, #tpu.memory_space<smem>>
    %29 = arith.index_cast %28 : i32 to index
    %c0_13 = arith.constant 0 : index
    %30 = vector.load %arg1[%29, %c0_13] : memref<100x32xf32, #tpu.memory_space<vmem>>, vector<1x32xf32>
    %31 = arith.index_cast %c2_i32 : i32 to index
    %c1_14 = arith.constant 1 : index
    %32 = memref.load %arg0[%31, %c1_14] : memref<8x2xi32, #tpu.memory_space<smem>>
    %33 = arith.index_cast %32 : i32 to index
    %c0_15 = arith.constant 0 : index
    %34 = vector.load %arg1[%33, %c0_15] : memref<100x32xf32, #tpu.memory_space<vmem>>, vector<1x32xf32>
    %35 = tpu.concatenate %30, %34 in 0 : vector<1x32xf32>, vector<1x32xf32> -> vector<2x32xf32>
    %c0_16 = arith.constant 0 : index
    %c0_17 = arith.constant 0 : index
    %36 = vector.load %arg2[%c0_16, %c0_17] : memref<32x32xf32, #tpu.memory_space<vmem>>, vector<32x32xf32>
    %cst_18 = arith.constant dense<0.000000e+00> : vector<2x32xf32>
    %37 = tpu.matmul %26, %36, %cst_18 {dimension_numbers = #tpu.dot_dimension_numbers<[1], [0], [0], [1], [0, 0, 1, 1], [], []>} : vector<2x32xf32>, vector<32x32xf32>, vector<2x32xf32> -> vector<2x32xf32>
    %38 = arith.addf %35, %37 : vector<2x32xf32>
    %39 = math.tanh %38 : vector<2x32xf32>
    %c3_i32 = arith.constant 3 : i32
    %40 = arith.index_cast %c3_i32 : i32 to index
    %c0_19 = arith.constant 0 : index
    %41 = memref.load %arg0[%40, %c0_19] : memref<8x2xi32, #tpu.memory_space<smem>>
    %42 = arith.index_cast %41 : i32 to index
    %c0_20 = arith.constant 0 : index
    %43 = vector.load %arg1[%42, %c0_20] : memref<100x32xf32, #tpu.memory_space<vmem>>, vector<1x32xf32>
    %44 = arith.index_cast %c3_i32 : i32 to index
    %c1_21 = arith.constant 1 : index
    %45 = memref.load %arg0[%44, %c1_21] : memref<8x2xi32, #tpu.memory_space<smem>>
    %46 = arith.index_cast %45 : i32 to index
    %c0_22 = arith.constant 0 : index
    %47 = vector.load %arg1[%46, %c0_22] : memref<100x32xf32, #tpu.memory_space<vmem>>, vector<1x32xf32>
    %48 = tpu.concatenate %43, %47 in 0 : vector<1x32xf32>, vector<1x32xf32> -> vector<2x32xf32>
    %c0_23 = arith.constant 0 : index
    %c0_24 = arith.constant 0 : index
    %49 = vector.load %arg2[%c0_23, %c0_24] : memref<32x32xf32, #tpu.memory_space<vmem>>, vector<32x32xf32>
    %cst_25 = arith.constant dense<0.000000e+00> : vector<2x32xf32>
    %50 = tpu.matmul %39, %49, %cst_25 {dimension_numbers = #tpu.dot_dimension_numbers<[1], [0], [0], [1], [0, 0, 1, 1], [], []>} : vector<2x32xf32>, vector<32x32xf32>, vector<2x32xf32> -> vector<2x32xf32>
    %51 = arith.addf %48, %50 : vector<2x32xf32>
    %52 = math.tanh %51 : vector<2x32xf32>
    %c4_i32 = arith.constant 4 : i32
    %53 = arith.index_cast %c4_i32 : i32 to index
    %c0_26 = arith.constant 0 : index
    %54 = memref.load %arg0[%53, %c0_26] : memref<8x2xi32, #tpu.memory_space<smem>>
    %55 = arith.index_cast %54 : i32 to index
    %c0_27 = arith.constant 0 : index
    %56 = vector.load %arg1[%55, %c0_27] : memref<100x32xf32, #tpu.memory_space<vmem>>, vector<1x32xf32>
    %57 = arith.index_cast %c4_i32 : i32 to index
    %c1_28 = arith.constant 1 : index
    %58 = memref.load %arg0[%57, %c1_28] : memref<8x2xi32, #tpu.memory_space<smem>>
    %59 = arith.index_cast %58 : i32 to index
    %c0_29 = arith.constant 0 : index
    %60 = vector.load %arg1[%59, %c0_29] : memref<100x32xf32, #tpu.memory_space<vmem>>, vector<1x32xf32>
    %61 = tpu.concatenate %56, %60 in 0 : vector<1x32xf32>, vector<1x32xf32> -> vector<2x32xf32>
    %c0_30 = arith.constant 0 : index
    %c0_31 = arith.constant 0 : index
    %62 = vector.load %arg2[%c0_30, %c0_31] : memref<32x32xf32, #tpu.memory_space<vmem>>, vector<32x32xf32>
    %cst_32 = arith.constant dense<0.000000e+00> : vector<2x32xf32>
    %63 = tpu.matmul %52, %62, %cst_32 {dimension_numbers = #tpu.dot_dimension_numbers<[1], [0], [0], [1], [0, 0, 1, 1], [], []>} : vector<2x32xf32>, vector<32x32xf32>, vector<2x32xf32> -> vector<2x32xf32>
    %64 = arith.addf %61, %63 : vector<2x32xf32>
    %65 = math.tanh %64 : vector<2x32xf32>
    %c5_i32 = arith.constant 5 : i32
    %66 = arith.index_cast %c5_i32 : i32 to index
    %c0_33 = arith.constant 0 : index
    %67 = memref.load %arg0[%66, %c0_33] : memref<8x2xi32, #tpu.memory_space<smem>>
    %68 = arith.index_cast %67 : i32 to index
    %c0_34 = arith.constant 0 : index
    %69 = vector.load %arg1[%68, %c0_34] : memref<100x32xf32, #tpu.memory_space<vmem>>, vector<1x32xf32>
    %70 = arith.index_cast %c5_i32 : i32 to index
    %c1_35 = arith.constant 1 : index
    %71 = memref.load %arg0[%70, %c1_35] : memref<8x2xi32, #tpu.memory_space<smem>>
    %72 = arith.index_cast %71 : i32 to index
    %c0_36 = arith.constant 0 : index
    %73 = vector.load %arg1[%72, %c0_36] : memref<100x32xf32, #tpu.memory_space<vmem>>, vector<1x32xf32>
    %74 = tpu.concatenate %69, %73 in 0 : vector<1x32xf32>, vector<1x32xf32> -> vector<2x32xf32>
    %c0_37 = arith.constant 0 : index
    %c0_38 = arith.constant 0 : index
    %75 = vector.load %arg2[%c0_37, %c0_38] : memref<32x32xf32, #tpu.memory_space<vmem>>, vector<32x32xf32>
    %cst_39 = arith.constant dense<0.000000e+00> : vector<2x32xf32>
    %76 = tpu.matmul %65, %75, %cst_39 {dimension_numbers = #tpu.dot_dimension_numbers<[1], [0], [0], [1], [0, 0, 1, 1], [], []>} : vector<2x32xf32>, vector<32x32xf32>, vector<2x32xf32> -> vector<2x32xf32>
    %77 = arith.addf %74, %76 : vector<2x32xf32>
    %78 = math.tanh %77 : vector<2x32xf32>
    %c6_i32 = arith.constant 6 : i32
    %79 = arith.index_cast %c6_i32 : i32 to index
    %c0_40 = arith.constant 0 : index
    %80 = memref.load %arg0[%79, %c0_40] : memref<8x2xi32, #tpu.memory_space<smem>>
    %81 = arith.index_cast %80 : i32 to index
    %c0_41 = arith.constant 0 : index
    %82 = vector.load %arg1[%81, %c0_41] : memref<100x32xf32, #tpu.memory_space<vmem>>, vector<1x32xf32>
    %83 = arith.index_cast %c6_i32 : i32 to index
    %c1_42 = arith.constant 1 : index
    %84 = memref.load %arg0[%83, %c1_42] : memref<8x2xi32, #tpu.memory_space<smem>>
    %85 = arith.index_cast %84 : i32 to index
    %c0_43 = arith.constant 0 : index
    %86 = vector.load %arg1[%85, %c0_43] : memref<100x32xf32, #tpu.memory_space<vmem>>, vector<1x32xf32>
    %87 = tpu.concatenate %82, %86 in 0 : vector<1x32xf32>, vector<1x32xf32> -> vector<2x32xf32>
    %c0_44 = arith.constant 0 : index
    %c0_45 = arith.constant 0 : index
    %88 = vector.load %arg2[%c0_44, %c0_45] : memref<32x32xf32, #tpu.memory_space<vmem>>, vector<32x32xf32>
    %cst_46 = arith.constant dense<0.000000e+00> : vector<2x32xf32>
    %89 = tpu.matmul %78, %88, %cst_46 {dimension_numbers = #tpu.dot_dimension_numbers<[1], [0], [0], [1], [0, 0, 1, 1], [], []>} : vector<2x32xf32>, vector<32x32xf32>, vector<2x32xf32> -> vector<2x32xf32>
    %90 = arith.addf %87, %89 : vector<2x32xf32>
    %91 = math.tanh %90 : vector<2x32xf32>
    %c7_i32 = arith.constant 7 : i32
    %92 = arith.index_cast %c7_i32 : i32 to index
    %c0_47 = arith.constant 0 : index
    %93 = memref.load %arg0[%92, %c0_47] : memref<8x2xi32, #tpu.memory_space<smem>>
    %94 = arith.index_cast %93 : i32 to index
    %c0_48 = arith.constant 0 : index
    %95 = vector.load %arg1[%94, %c0_48] : memref<100x32xf32, #tpu.memory_space<vmem>>, vector<1x32xf32>
    %96 = arith.index_cast %c7_i32 : i32 to index
    %c1_49 = arith.constant 1 : index
    %97 = memref.load %arg0[%96, %c1_49] : memref<8x2xi32, #tpu.memory_space<smem>>
    %98 = arith.index_cast %97 : i32 to index
    %c0_50 = arith.constant 0 : index
    %99 = vector.load %arg1[%98, %c0_50] : memref<100x32xf32, #tpu.memory_space<vmem>>, vector<1x32xf32>
    %100 = tpu.concatenate %95, %99 in 0 : vector<1x32xf32>, vector<1x32xf32> -> vector<2x32xf32>
    %c0_51 = arith.constant 0 : index
    %c0_52 = arith.constant 0 : index
    %101 = vector.load %arg2[%c0_51, %c0_52] : memref<32x32xf32, #tpu.memory_space<vmem>>, vector<32x32xf32>
    %cst_53 = arith.constant dense<0.000000e+00> : vector<2x32xf32>
    %102 = tpu.matmul %91, %101, %cst_53 {dimension_numbers = #tpu.dot_dimension_numbers<[1], [0], [0], [1], [0, 0, 1, 1], [], []>} : vector<2x32xf32>, vector<32x32xf32>, vector<2x32xf32> -> vector<2x32xf32>
    %103 = arith.addf %100, %102 : vector<2x32xf32>
    %104 = math.tanh %103 : vector<2x32xf32>
    %c8_i32 = arith.constant 8 : i32
    %c0_54 = arith.constant 0 : index
    %c0_55 = arith.constant 0 : index
    %105 = vector.load %arg3[%c0_54, %c0_55] : memref<32x128xf32, #tpu.memory_space<vmem>>, vector<32x128xf32>
    %cst_56 = arith.constant dense<0.000000e+00> : vector<2x128xf32>
    %106 = tpu.matmul %104, %105, %cst_56 {dimension_numbers = #tpu.dot_dimension_numbers<[1], [0], [0], [1], [0, 0, 1, 1], [], []>} : vector<2x32xf32>, vector<32x128xf32>, vector<2x128xf32> -> vector<2x128xf32>
    %c0_57 = arith.constant 0 : index
    %c0_58 = arith.constant 0 : index
    %107 = vector.load %arg4[%c0_57, %c0_58] : memref<1x128xf32, #tpu.memory_space<vmem>>, vector<1x128xf32>
    %108 = vector.broadcast %107 : vector<1x128xf32> to vector<2x128xf32>
    %109 = arith.addf %106, %108 : vector<2x128xf32>
    %c0_59 = arith.constant 0 : index
    %c0_60 = arith.constant 0 : index
    %110 = vector.load %arg5[%c0_59, %c0_60] : memref<2x128xf32, #tpu.memory_space<vmem>>, vector<2x128xf32>
    tpu.vector_store %arg5[%c0_59, %c0_60], %109 {strides = array<i32>} : memref<2x128xf32, #tpu.memory_space<vmem>>, vector<2x128xf32>,
    return
  }
}

</mosaic_0001>

<llo_original>
// kernel: tpu_custom_call.1
$region0: #{tpu_custom_call.1}
  #allocation0 [shape = 'u32[]', space=smem, size = 0x4, offset = 0x4, fixed_abs, tag = 'smem constant byte address 0x4 - core index']
  #allocation1 [shape = 'u32[144,128]{1,0:T(1,128)}', space=vmem, size = 0x12000, scoped, tag = 'internal scratch']
  %s0 = inlined_call_operand.vmem [shape: s32[8,2], index: 0, kind: input, shape index: {}]
  %s1 = inlined_call_operand.vmem [shape: f32[100,32], index: 1, kind: input, shape index: {}]
  %s2 = inlined_call_operand.vmem [shape: f32[32,32], index: 2, kind: input, shape index: {}]
  %s3 = inlined_call_operand.vmem [shape: f32[32,128], index: 3, kind: input, shape index: {}]
  %s4 = inlined_call_operand.vmem [shape: f32[1,128], index: 4, kind: input, shape index: {}]
  %s5 = inlined_call_operand.hbm [shape: f32[2,128], index: 5, kind: output, shape index: {}]
  %s6 = sld [smem:[#allocation0]]
  $region34: #{tpu_custom_call.1} parent=0
    _
  %s8 = ssub.s32 1, %s6
  %s9 = scalar_select 0, %s8, %s6
  $region1: #{tpu_custom_call.1} parent=0
    #allocation2 [shape = 'u8[4096]{0}', space=smem, size = 0x1000, scoped, tag = 'input window, operand 0, single buffered']
    #allocation3 [shape = 's32[1]{0}', space=sflag, size = 0x4, scoped, tag = 'scoped memory for tpu_custom_call.1']
    #allocation4 [shape = 's32[1]{0}', space=sflag, size = 0x4, scoped, tag = 'scoped memory for tpu_custom_call.1']
    #allocation5 [shape = 'u8[1024]{0}', space=vmem, size = 0x400, scoped, tag = 'output window, operand 0, single buffered']
    %10 = vsyncpa [#allocation4], 0
    %11 = vsyncpa [#allocation3], 0
    // Predicated region
    $region2: #{tpu_custom_call.1} parent=1 // pred_check
      _
    $region3: #{tpu_custom_call.1} parent=1 // pred_check_branch
      %13 = sbr.rel (0) target = $region5
    $region4: #{tpu_custom_call.1} parent=1 // pred_region
      %s15 = ssub.s32 128, 128
      %16 = vsyncadd [#allocation4], %s15
      %s18 = sshll.u32 %s0, 4
      %s19 = int_to_ptr.vmem [resolvable:$true] %s18
      %21 = dma.vmem_to_smem %s19, 128, [#allocation2], [#allocation4]
    $region5: #{tpu_custom_call.1} parent=1 // pred_fallthru
      _
    // Predicated region
    $region6: #{tpu_custom_call.1} parent=1 // pred_check
      _
    $region7: #{tpu_custom_call.1} parent=1 // pred_check_branch
      %23 = sbr.rel (0) target = $region9
    $region8: #{tpu_custom_call.1} parent=1 // pred_region
      _
    $region9: #{tpu_custom_call.1} parent=1 // pred_fallthru
      _
    // Predicated region
    $region10: #{tpu_custom_call.1} parent=1 // pred_check
      _
    $region11: #{tpu_custom_call.1} parent=1 // pred_check_branch
      %25 = sbr.rel (0) target = $region13
    $region12: #{tpu_custom_call.1} parent=1 // pred_region
      _
    $region13: #{tpu_custom_call.1} parent=1 // pred_fallthru
      _
    // Predicated region
    $region14: #{tpu_custom_call.1} parent=1 // pred_check
      _
    $region15: #{tpu_custom_call.1} parent=1 // pred_check_branch
      %27 = sbr.rel (0) target = $region17
    $region16: #{tpu_custom_call.1} parent=1 // pred_region
      _
    $region17: #{tpu_custom_call.1} parent=1 // pred_fallthru
      _
    // Predicated region
    $region18: #{tpu_custom_call.1} parent=1 // pred_check
      _
    $region19: #{tpu_custom_call.1} parent=1 // pred_check_branch
      %29 = sbr.rel (0) target = $region21
    $region20: #{tpu_custom_call.1} parent=1 // pred_region
      _
    $region21: #{tpu_custom_call.1} parent=1 // pred_fallthru
      _
    // Predicated region
    $region22: #{tpu_custom_call.1} parent=1 // pred_check
      _
    $region23: #{tpu_custom_call.1} parent=1 // pred_check_branch
      %31 = sbr.rel (0) target = $region25
    $region24: #{tpu_custom_call.1} parent=1 // pred_region
      %32 = dma.done [#allocation4], 128
    $region25: #{tpu_custom_call.1} parent=1 // pred_fallthru
      _
    %33 = sfence
    %s34 = sld [smem:[#allocation2]]
    %s35 = scalar_lea.vmem %s1, %s34
    %v36 = vld [vmem:[%s35] sm:$0x1]
    %s37 = sld [smem:[#allocation2 + $0x1]]
    %s38 = scalar_lea.vmem %s1, %s37
    %v39 = vld [vmem:[%s38] sm:$0x1]
    %v41 = vrot.slane %v39, 7
    %vm43 = vcmask 1040384
    %v44 = vsel %vm43, %v36, %v41
    %v45 = vld [vmem:[%s2] sm:$0xff]
    %v46 = vld [vmem:[%s2 + $0x8] sm:$0xff]
    %v47 = vld [vmem:[%s2 + $0x10] sm:$0xff]
    %v48 = vld [vmem:[%s2 + $0x18] sm:$0xff]
    %vm49 = vcmask 261120
    %v51 = vsel %vm49, 0.0, 0
    %53 = vmatprep.subr.mxu0 0.0
    %54 = vmatpush1.msra.mxu0 %v45
    %55 = vmatprep.subr.mxu0 0.0
    %56 = vmatpush1.msra.mxu0 %v46
    %57 = vmatprep.subr.mxu0 0.0
    %58 = vmatpush1.msra.mxu0 %v47
    %59 = vmatprep.subr.mxu0 0.0
    %60 = vmatpush1.msra.mxu0 %v48
    %61 = vmatprep.subr.mxu0 0.0
    %62 = vmatpush1.msra.mxu0 0.0
    %63 = vmatprep.subr.mxu0 0.0
    %64 = vmatpush1.msra.mxu0 0.0
    %65 = vmatprep.subr.mxu0 0.0
    %66 = vmatpush1.msra.mxu0 0.0
    %67 = vmatprep.subr.mxu0 0.0
    %68 = vmatpush1.msra.mxu0 0.0
    %69 = vmatprep.subr.mxu0 0.0
    %70 = vmatpush1.msra.mxu0 0.0
    %71 = vmatprep.subr.mxu0 0.0
    %72 = vmatpush1.msra.mxu0 0.0
    %73 = vmatprep.subr.mxu0 0.0
    %74 = vmatpush1.msra.mxu0 0.0
    %75 = vmatprep.subr.mxu0 0.0
    %76 = vmatpush1.msra.mxu0 0.0
    %77 = vmatprep.subr.mxu0 0.0
    %78 = vmatpush1.msra.mxu0 0.0
    %79 = vmatprep.subr.mxu0 0.0
    %80 = vmatpush1.msra.mxu0 0.0
    %81 = vmatprep.subr.mxu0 0.0
    %82 = vmatpush1.msra.mxu0 0.0
    %83 = vmatprep.subr.mxu0 0.0
    %84 = vmatpush1.msra.mxu0 0.0
    %85 = vmatprep.subr.mxu0 0.0
    %86 = vmatpush1.msra.mxu0 0.0
    %87 = vmatprep.subr.mxu0 0.0
    %88 = vmatpush1.msra.mxu0 0.0
    %89 = vmatprep.subr.mxu0 0.0
    %90 = vmatpush1.msra.mxu0 0.0
    %91 = vmatprep.subr.mxu0 0.0
    %92 = vmatpush1.msra.mxu0 0.0
    %93 = vmatprep.subr.mxu0 0.0
    %94 = vmatpush1.msra.mxu0 0.0
    %95 = vmatprep.subr.mxu0 0.0
    %96 = vmatpush1.msra.mxu0 0.0
    %97 = vmatprep.subr.mxu0 0.0
    %98 = vmatpush1.msra.mxu0 0.0
    %99 = vmatprep.subr.mxu0 0.0
    %100 = vmatpush1.msra.mxu0 0.0
    %101 = vmatprep.subr.mxu0 0.0
    %102 = vmatpush1.msra.mxu0 0.0
    %103 = vmatprep.subr.mxu0 0.0
    %104 = vmatpush1.msra.mxu0 0.0
    %105 = vmatprep.subr.mxu0 0.0
    %106 = vmatpush1.msra.mxu0 0.0
    %107 = vmatprep.subr.mxu0 0.0
    %108 = vmatpush1.msra.mxu0 0.0
    %109 = vmatprep.subr.mxu0 0.0
    %110 = vmatpush1.msra.mxu0 0.0
    %111 = vmatprep.subr.mxu0 0.0
    %112 = vmatpush1.msra.mxu0 0.0
    %113 = vmatprep.subr.mxu0 0.0
    %114 = vmatpush1.msra.mxu0 0.0
    %115 = vmatprep.subr.mxu0 0.0
    %116 = vmatpush1.msra.mxu0 0.0
    %117 = vmatprep.mubr.f32.mxu0 0.0
    %118 = vmatmul.mubr.f32.gmra.mrb[0].mxu0 %v51
    %v119 = vpop.f32.mrb[0].mxu0
    %v120 = vadd.f32 0.0, %v119
    %v121 = vpop.f32.mrb[0].mxu0
    %122 = vdwg.mxu0
    %v123 = vadd.f32 %v44, %v120
    %v124 = vtanh.pop %v123
    %s125 = sld [smem:[#allocation2 + $0x80]]
    %s126 = scalar_lea.vmem %s1, %s125
    %v127 = vld [vmem:[%s126] sm:$0x1]
    %s128 = sld [smem:[#allocation2 + $0x81]]
    %s129 = scalar_lea.vmem %s1, %s128
    %v130 = vld [vmem:[%s129] sm:$0x1]
    %v132 = vrot.slane %v130, 7
    %v134 = vsel %vm43, %v127, %v132
    %v136 = vsel %vm49, %v124, 0
    %138 = vmatprep.subr.mxu0 0.0
    %139 = vmatpush1.msra.mxu0 %v45
    %140 = vmatprep.subr.mxu0 0.0
    %141 = vmatpush1.msra.mxu0 %v46
    %142 = vmatprep.subr.mxu0 0.0
    %143 = vmatpush1.msra.mxu0 %v47
    %144 = vmatprep.subr.mxu0 0.0
    %145 = vmatpush1.msra.mxu0 %v48
    %146 = vmatprep.subr.mxu0 0.0
    %147 = vmatpush1.msra.mxu0 0.0
    %148 = vmatprep.subr.mxu0 0.0
    %149 = vmatpush1.msra.mxu0 0.0
    %150 = vmatprep.subr.mxu0 0.0
    %151 = vmatpush1.msra.mxu0 0.0
    %152 = vmatprep.subr.mxu0 0.0
    %153 = vmatpush1.msra.mxu0 0.0
    %154 = vmatprep.subr.mxu0 0.0
    %155 = vmatpush1.msra.mxu0 0.0
    %156 = vmatprep.subr.mxu0 0.0
    %157 = vmatpush1.msra.mxu0 0.0
    %158 = vmatprep.subr.mxu0 0.0
    %159 = vmatpush1.msra.mxu0 0.0
    %160 = vmatprep.subr.mxu0 0.0
    %161 = vmatpush1.msra.mxu0 0.0
    %162 = vmatprep.subr.mxu0 0.0
    %163 = vmatpush1.msra.mxu0 0.0
    %164 = vmatprep.subr.mxu0 0.0
    %165 = vmatpush1.msra.mxu0 0.0
    %166 = vmatprep.subr.mxu0 0.0
    %167 = vmatpush1.msra.mxu0 0.0
    %168 = vmatprep.subr.mxu0 0.0
    %169 = vmatpush1.msra.mxu0 0.0
    %170 = vmatprep.subr.mxu0 0.0
    %171 = vmatpush1.msra.mxu0 0.0
    %172 = vmatprep.subr.mxu0 0.0
    %173 = vmatpush1.msra.mxu0 0.0
    %174 = vmatprep.subr.mxu0 0.0
    %175 = vmatpush1.msra.mxu0 0.0
    %176 = vmatprep.subr.mxu0 0.0
    %177 = vmatpush1.msra.mxu0 0.0
    %178 = vmatprep.subr.mxu0 0.0
    %179 = vmatpush1.msra.mxu0 0.0
    %180 = vmatprep.subr.mxu0 0.0
    %181 = vmatpush1.msra.mxu0 0.0
    %182 = vmatprep.subr.mxu0 0.0
    %183 = vmatpush1.msra.mxu0 0.0
    %184 = vmatprep.subr.mxu0 0.0
    %185 = vmatpush1.msra.mxu0 0.0
    %186 = vmatprep.subr.mxu0 0.0
    %187 = vmatpush1.msra.mxu0 0.0
    %188 = vmatprep.subr.mxu0 0.0
    %189 = vmatpush1.msra.mxu0 0.0
    %190 = vmatprep.subr.mxu0 0.0
    %191 = vmatpush1.msra.mxu0 0.0
    %192 = vmatprep.subr.mxu0 0.0
    %193 = vmatpush1.msra.mxu0 0.0
    %194 = vmatprep.subr.mxu0 0.0
    %195 = vmatpush1.msra.mxu0 0.0
    %196 = vmatprep.subr.mxu0 0.0
    %197 = vmatpush1.msra.mxu0 0.0
    %198 = vmatprep.subr.mxu0 0.0
    %199 = vmatpush1.msra.mxu0 0.0
    %200 = vmatprep.subr.mxu0 0.0
    %201 = vmatpush1.msra.mxu0 0.0
    %202 = vmatprep.mubr.f32.mxu0 0.0
    %203 = vmatmul.mubr.f32.gmra.mrb[0].mxu0 %v136
    %v204 = vpop.f32.mrb[0].mxu0
    %v205 = vadd.f32 0.0, %v204
    %v206 = vpop.f32.mrb[0].mxu0
    %207 = vdwg.mxu0
    %v208 = vadd.f32 %v134, %v205
    %v209 = vtanh.pop %v208
    %s210 = sld [smem:[#allocation2 + $0x100]]
    %s211 = scalar_lea.vmem %s1, %s210
    %v212 = vld [vmem:[%s211] sm:$0x1]
    %s213 = sld [smem:[#allocation2 + $0x101]]
    %s214 = scalar_lea.vmem %s1, %s213
    %v215 = vld [vmem:[%s214] sm:$0x1]
    %v217 = vrot.slane %v215, 7
    %v219 = vsel %vm43, %v212, %v217
    %v221 = vsel %vm49, %v209, 0
    %223 = vmatprep.subr.mxu0 0.0
    %224 = vmatpush1.msra.mxu0 %v45
    %225 = vmatprep.subr.mxu0 0.0
    %226 = vmatpush1.msra.mxu0 %v46
    %227 = vmatprep.subr.mxu0 0.0
    %228 = vmatpush1.msra.mxu0 %v47
    %229 = vmatprep.subr.mxu0 0.0
    %230 = vmatpush1.msra.mxu0 %v48
    %231 = vmatprep.subr.mxu0 0.0
    %232 = vmatpush1.msra.mxu0 0.0
    %233 = vmatprep.subr.mxu0 0.0
    %234 = vmatpush1.msra.mxu0 0.0
    %235 = vmatprep.subr.mxu0 0.0
    %236 = vmatpush1.msra.mxu0 0.0
    %237 = vmatprep.subr.mxu0 0.0
    %238 = vmatpush1.msra.mxu0 0.0
    %239 = vmatprep.subr.mxu0 0.0
    %240 = vmatpush1.msra.mxu0 0.0
    %241 = vmatprep.subr.mxu0 0.0
    %242 = vmatpush1.msra.mxu0 0.0
    %243 = vmatprep.subr.mxu0 0.0
    %244 = vmatpush1.msra.mxu0 0.0
    %245 = vmatprep.subr.mxu0 0.0
    %246 = vmatpush1.msra.mxu0 0.0
    %247 = vmatprep.subr.mxu0 0.0
    %248 = vmatpush1.msra.mxu0 0.0
    %249 = vmatprep.subr.mxu0 0.0
    %250 = vmatpush1.msra.mxu0 0.0
    %251 = vmatprep.subr.mxu0 0.0
    %252 = vmatpush1.msra.mxu0 0.0
    %253 = vmatprep.subr.mxu0 0.0
    %254 = vmatpush1.msra.mxu0 0.0
    %255 = vmatprep.subr.mxu0 0.0
    %256 = vmatpush1.msra.mxu0 0.0
    %257 = vmatprep.subr.mxu0 0.0
    %258 = vmatpush1.msra.mxu0 0.0
    %259 = vmatprep.subr.mxu0 0.0
    %260 = vmatpush1.msra.mxu0 0.0
    %261 = vmatprep.subr.mxu0 0.0
    %262 = vmatpush1.msra.mxu0 0.0
    %263 = vmatprep.subr.mxu0 0.0
    %264 = vmatpush1.msra.mxu0 0.0
    %265 = vmatprep.subr.mxu0 0.0
    %266 = vmatpush1.msra.mxu0 0.0
    %267 = vmatprep.subr.mxu0 0.0
    %268 = vmatpush1.msra.mxu0 0.0
    %269 = vmatprep.subr.mxu0 0.0
    %270 = vmatpush1.msra.mxu0 0.0
    %271 = vmatprep.subr.mxu0 0.0
    %272 = vmatpush1.msra.mxu0 0.0
    %273 = vmatprep.subr.mxu0 0.0
    %274 = vmatpush1.msra.mxu0 0.0
    %275 = vmatprep.subr.mxu0 0.0
    %276 = vmatpush1.msra.mxu0 0.0
    %277 = vmatprep.subr.mxu0 0.0
    %278 = vmatpush1.msra.mxu0 0.0
    %279 = vmatprep.subr.mxu0 0.0
    %280 = vmatpush1.msra.mxu0 0.0
    %281 = vmatprep.subr.mxu0 0.0
    %282 = vmatpush1.msra.mxu0 0.0
    %283 = vmatprep.subr.mxu0 0.0
    %284 = vmatpush1.msra.mxu0 0.0
    %285 = vmatprep.subr.mxu0 0.0
    %286 = vmatpush1.msra.mxu0 0.0
    %287 = vmatprep.mubr.f32.mxu0 0.0
    %288 = vmatmul.mubr.f32.gmra.mrb[0].mxu0 %v221
    %v289 = vpop.f32.mrb[0].mxu0
    %v290 = vadd.f32 0.0, %v289
    %v291 = vpop.f32.mrb[0].mxu0
    %292 = vdwg.mxu0
    %v293 = vadd.f32 %v219, %v290
    %v294 = vtanh.pop %v293
    %s295 = sld [smem:[#allocation2 + $0x180]]
    %s296 = scalar_lea.vmem %s1, %s295
    %v297 = vld [vmem:[%s296] sm:$0x1]
    %s298 = sld [smem:[#allocation2 + $0x181]]
    %s299 = scalar_lea.vmem %s1, %s298
    %v300 = vld [vmem:[%s299] sm:$0x1]
    %v302 = vrot.slane %v300, 7
    %v304 = vsel %vm43, %v297, %v302
    %v306 = vsel %vm49, %v294, 0
    %308 = vmatprep.subr.mxu0 0.0
    %309 = vmatpush1.msra.mxu0 %v45
    %310 = vmatprep.subr.mxu0 0.0
    %311 = vmatpush1.msra.mxu0 %v46
    %312 = vmatprep.subr.mxu0 0.0
    %313 = vmatpush1.msra.mxu0 %v47
    %314 = vmatprep.subr.mxu0 0.0
    %315 = vmatpush1.msra.mxu0 %v48
    %316 = vmatprep.subr.mxu0 0.0
    %317 = vmatpush1.msra.mxu0 0.0
    %318 = vmatprep.subr.mxu0 0.0
    %319 = vmatpush1.msra.mxu0 0.0
    %320 = vmatprep.subr.mxu0 0.0
    %321 = vmatpush1.msra.mxu0 0.0
    %322 = vmatprep.subr.mxu0 0.0
    %323 = vmatpush1.msra.mxu0 0.0
    %324 = vmatprep.subr.mxu0 0.0
    %325 = vmatpush1.msra.mxu0 0.0
    %326 = vmatprep.subr.mxu0 0.0
    %327 = vmatpush1.msra.mxu0 0.0
    %328 = vmatprep.subr.mxu0 0.0
    %329 = vmatpush1.msra.mxu0 0.0
    %330 = vmatprep.subr.mxu0 0.0
    %331 = vmatpush1.msra.mxu0 0.0
    %332 = vmatprep.subr.mxu0 0.0
    %333 = vmatpush1.msra.mxu0 0.0
    %334 = vmatprep.subr.mxu0 0.0
    %335 = vmatpush1.msra.mxu0 0.0
    %336 = vmatprep.subr.mxu0 0.0
    %337 = vmatpush1.msra.mxu0 0.0
    %338 = vmatprep.subr.mxu0 0.0
    %339 = vmatpush1.msra.mxu0 0.0
    %340 = vmatprep.subr.mxu0 0.0
    %341 = vmatpush1.msra.mxu0 0.0
    %342 = vmatprep.subr.mxu0 0.0
    %343 = vmatpush1.msra.mxu0 0.0
    %344 = vmatprep.subr.mxu0 0.0
    %345 = vmatpush1.msra.mxu0 0.0
    %346 = vmatprep.subr.mxu0 0.0
    %347 = vmatpush1.msra.mxu0 0.0
    %348 = vmatprep.subr.mxu0 0.0
    %349 = vmatpush1.msra.mxu0 0.0
    %350 = vmatprep.subr.mxu0 0.0
    %351 = vmatpush1.msra.mxu0 0.0
    %352 = vmatprep.subr.mxu0 0.0
    %353 = vmatpush1.msra.mxu0 0.0
    %354 = vmatprep.subr.mxu0 0.0
    %355 = vmatpush1.msra.mxu0 0.0
    %356 = vmatprep.subr.mxu0 0.0
    %357 = vmatpush1.msra.mxu0 0.0
    %358 = vmatprep.subr.mxu0 0.0
    %359 = vmatpush1.msra.mxu0 0.0
    %360 = vmatprep.subr.mxu0 0.0
    %361 = vmatpush1.msra.mxu0 0.0
    %362 = vmatprep.subr.mxu0 0.0
    %363 = vmatpush1.msra.mxu0 0.0
    %364 = vmatprep.subr.mxu0 0.0
    %365 = vmatpush1.msra.mxu0 0.0
    %366 = vmatprep.subr.mxu0 0.0
    %367 = vmatpush1.msra.mxu0 0.0
    %368 = vmatprep.subr.mxu0 0.0
    %369 = vmatpush1.msra.mxu0 0.0
    %370 = vmatprep.subr.mxu0 0.0
    %371 = vmatpush1.msra.mxu0 0.0
    %372 = vmatprep.mubr.f32.mxu0 0.0
    %373 = vmatmul.mubr.f32.gmra.mrb[0].mxu0 %v306
    %v374 = vpop.f32.mrb[0].mxu0
    %v375 = vadd.f32 0.0, %v374
    %v376 = vpop.f32.mrb[0].mxu0
    %377 = vdwg.mxu0
    %v378 = vadd.f32 %v304, %v375
    %v379 = vtanh.pop %v378
    %s380 = sld [smem:[#allocation2 + $0x200]]
    %s381 = scalar_lea.vmem %s1, %s380
    %v382 = vld [vmem:[%s381] sm:$0x1]
    %s383 = sld [smem:[#allocation2 + $0x201]]
    %s384 = scalar_lea.vmem %s1, %s383
    %v385 = vld [vmem:[%s384] sm:$0x1]
    %v387 = vrot.slane %v385, 7
    %v389 = vsel %vm43, %v382, %v387
    %v391 = vsel %vm49, %v379, 0
    %393 = vmatprep.subr.mxu0 0.0
    %394 = vmatpush1.msra.mxu0 %v45
    %395 = vmatprep.subr.mxu0 0.0
    %396 = vmatpush1.msra.mxu0 %v46
    %397 = vmatprep.subr.mxu0 0.0
    %398 = vmatpush1.msra.mxu0 %v47
    %399 = vmatprep.subr.mxu0 0.0
    %400 = vmatpush1.msra.mxu0 %v48
    %401 = vmatprep.subr.mxu0 0.0
    %402 = vmatpush1.msra.mxu0 0.0
    %403 = vmatprep.subr.mxu0 0.0
    %404 = vmatpush1.msra.mxu0 0.0
    %405 = vmatprep.subr.mxu0 0.0
    %406 = vmatpush1.msra.mxu0 0.0
    %407 = vmatprep.subr.mxu0 0.0
    %408 = vmatpush1.msra.mxu0 0.0
    %409 = vmatprep.subr.mxu0 0.0
    %410 = vmatpush1.msra.mxu0 0.0
    %411 = vmatprep.subr.mxu0 0.0
    %412 = vmatpush1.msra.mxu0 0.0
    %413 = vmatprep.subr.mxu0 0.0
    %414 = vmatpush1.msra.mxu0 0.0
    %415 = vmatprep.subr.mxu0 0.0
    %416 = vmatpush1.msra.mxu0 0.0
    %417 = vmatprep.subr.mxu0 0.0
    %418 = vmatpush1.msra.mxu0 0.0
    %419 = vmatprep.subr.mxu0 0.0
    %420 = vmatpush1.msra.mxu0 0.0
    %421 = vmatprep.subr.mxu0 0.0
    %422 = vmatpush1.msra.mxu0 0.0
    %423 = vmatprep.subr.mxu0 0.0
    %424 = vmatpush1.msra.mxu0 0.0
    %425 = vmatprep.subr.mxu0 0.0
    %426 = vmatpush1.msra.mxu0 0.0
    %427 = vmatprep.subr.mxu0 0.0
    %428 = vmatpush1.msra.mxu0 0.0
    %429 = vmatprep.subr.mxu0 0.0
    %430 = vmatpush1.msra.mxu0 0.0
    %431 = vmatprep.subr.mxu0 0.0
    %432 = vmatpush1.msra.mxu0 0.0
    %433 = vmatprep.subr.mxu0 0.0
    %434 = vmatpush1.msra.mxu0 0.0
    %435 = vmatprep.subr.mxu0 0.0
    %436 = vmatpush1.msra.mxu0 0.0
    %437 = vmatprep.subr.mxu0 0.0
    %438 = vmatpush1.msra.mxu0 0.0
    %439 = vmatprep.subr.mxu0 0.0
    %440 = vmatpush1.msra.mxu0 0.0
    %441 = vmatprep.subr.mxu0 0.0
    %442 = vmatpush1.msra.mxu0 0.0
    %443 = vmatprep.subr.mxu0 0.0
    %444 = vmatpush1.msra.mxu0 0.0
    %445 = vmatprep.subr.mxu0 0.0
    %446 = vmatpush1.msra.mxu0 0.0
    %447 = vmatprep.subr.mxu0 0.0
    %448 = vmatpush1.msra.mxu0 0.0
    %449 = vmatprep.subr.mxu0 0.0
    %450 = vmatpush1.msra.mxu0 0.0
    %451 = vmatprep.subr.mxu0 0.0
    %452 = vmatpush1.msra.mxu0 0.0
    %453 = vmatprep.subr.mxu0 0.0
    %454 = vmatpush1.msra.mxu0 0.0
    %455 = vmatprep.subr.mxu0 0.0
    %456 = vmatpush1.msra.mxu0 0.0
    %457 = vmatprep.mubr.f32.mxu0 0.0
    %458 = vmatmul.mubr.f32.gmra.mrb[0].mxu0 %v391
    %v459 = vpop.f32.mrb[0].mxu0
    %v460 = vadd.f32 0.0, %v459
    %v461 = vpop.f32.mrb[0].mxu0
    %462 = vdwg.mxu0
    %v463 = vadd.f32 %v389, %v460
    %v464 = vtanh.pop %v463
    %s465 = sld [smem:[#allocation2 + $0x280]]
    %s466 = scalar_lea.vmem %s1, %s465
    %v467 = vld [vmem:[%s466] sm:$0x1]
    %s468 = sld [smem:[#allocation2 + $0x281]]
    %s469 = scalar_lea.vmem %s1, %s468
    %v470 = vld [vmem:[%s469] sm:$0x1]
    %v472 = vrot.slane %v470, 7
    %v474 = vsel %vm43, %v467, %v472
    %v476 = vsel %vm49, %v464, 0
    %478 = vmatprep.subr.mxu0 0.0
    %479 = vmatpush1.msra.mxu0 %v45
    %480 = vmatprep.subr.mxu0 0.0
    %481 = vmatpush1.msra.mxu0 %v46
    %482 = vmatprep.subr.mxu0 0.0
    %483 = vmatpush1.msra.mxu0 %v47
    %484 = vmatprep.subr.mxu0 0.0
    %485 = vmatpush1.msra.mxu0 %v48
    %486 = vmatprep.subr.mxu0 0.0
    %487 = vmatpush1.msra.mxu0 0.0
    %488 = vmatprep.subr.mxu0 0.0
    %489 = vmatpush1.msra.mxu0 0.0
    %490 = vmatprep.subr.mxu0 0.0
    %491 = vmatpush1.msra.mxu0 0.0
    %492 = vmatprep.subr.mxu0 0.0
    %493 = vmatpush1.msra.mxu0 0.0
    %494 = vmatprep.subr.mxu0 0.0
    %495 = vmatpush1.msra.mxu0 0.0
    %496 = vmatprep.subr.mxu0 0.0
    %497 = vmatpush1.msra.mxu0 0.0
    %498 = vmatprep.subr.mxu0 0.0
    %499 = vmatpush1.msra.mxu0 0.0
    %500 = vmatprep.subr.mxu0 0.0
    %501 = vmatpush1.msra.mxu0 0.0
    %502 = vmatprep.subr.mxu0 0.0
    %503 = vmatpush1.msra.mxu0 0.0
    %504 = vmatprep.subr.mxu0 0.0
    %505 = vmatpush1.msra.mxu0 0.0
    %506 = vmatprep.subr.mxu0 0.0
    %507 = vmatpush1.msra.mxu0 0.0
    %508 = vmatprep.subr.mxu0 0.0
    %509 = vmatpush1.msra.mxu0 0.0
    %510 = vmatprep.subr.mxu0 0.0
    %511 = vmatpush1.msra.mxu0 0.0
    %512 = vmatprep.subr.mxu0 0.0
    %513 = vmatpush1.msra.mxu0 0.0
    %514 = vmatprep.subr.mxu0 0.0
    %515 = vmatpush1.msra.mxu0 0.0
    %516 = vmatprep.subr.mxu0 0.0
    %517 = vmatpush1.msra.mxu0 0.0
    %518 = vmatprep.subr.mxu0 0.0
    %519 = vmatpush1.msra.mxu0 0.0
    %520 = vmatprep.subr.mxu0 0.0
    %521 = vmatpush1.msra.mxu0 0.0
    %522 = vmatprep.subr.mxu0 0.0
    %523 = vmatpush1.msra.mxu0 0.0
    %524 = vmatprep.subr.mxu0 0.0
    %525 = vmatpush1.msra.mxu0 0.0
    %526 = vmatprep.subr.mxu0 0.0
    %527 = vmatpush1.msra.mxu0 0.0
    %528 = vmatprep.subr.mxu0 0.0
    %529 = vmatpush1.msra.mxu0 0.0
    %530 = vmatprep.subr.mxu0 0.0
    %531 = vmatpush1.msra.mxu0 0.0
    %532 = vmatprep.subr.mxu0 0.0
    %533 = vmatpush1.msra.mxu0 0.0
    %534 = vmatprep.subr.mxu0 0.0
    %535 = vmatpush1.msra.mxu0 0.0
    %536 = vmatprep.subr.mxu0 0.0
    %537 = vmatpush1.msra.mxu0 0.0
    %538 = vmatprep.subr.mxu0 0.0
    %539 = vmatpush1.msra.mxu0 0.0
    %540 = vmatprep.subr.mxu0 0.0
    %541 = vmatpush1.msra.mxu0 0.0
    %542 = vmatprep.mubr.f32.mxu0 0.0
    %543 = vmatmul.mubr.f32.gmra.mrb[0].mxu0 %v476
    %v544 = vpop.f32.mrb[0].mxu0
    %v545 = vadd.f32 0.0, %v544
    %v546 = vpop.f32.mrb[0].mxu0
    %547 = vdwg.mxu0
    %v548 = vadd.f32 %v474, %v545
    %v549 = vtanh.pop %v548
    %s550 = sld [smem:[#allocation2 + $0x300]]
    %s551 = scalar_lea.vmem %s1, %s550
    %v552 = vld [vmem:[%s551] sm:$0x1]
    %s553 = sld [smem:[#allocation2 + $0x301]]
    %s554 = scalar_lea.vmem %s1, %s553
    %v555 = vld [vmem:[%s554] sm:$0x1]
    %v557 = vrot.slane %v555, 7
    %v559 = vsel %vm43, %v552, %v557
    %v561 = vsel %vm49, %v549, 0
    %563 = vmatprep.subr.mxu0 0.0
    %564 = vmatpush1.msra.mxu0 %v45
    %565 = vmatprep.subr.mxu0 0.0
    %566 = vmatpush1.msra.mxu0 %v46
    %567 = vmatprep.subr.mxu0 0.0
    %568 = vmatpush1.msra.mxu0 %v47
    %569 = vmatprep.subr.mxu0 0.0
    %570 = vmatpush1.msra.mxu0 %v48
    %571 = vmatprep.subr.mxu0 0.0
    %572 = vmatpush1.msra.mxu0 0.0
    %573 = vmatprep.subr.mxu0 0.0
    %574 = vmatpush1.msra.mxu0 0.0
    %575 = vmatprep.subr.mxu0 0.0
    %576 = vmatpush1.msra.mxu0 0.0
    %577 = vmatprep.subr.mxu0 0.0
    %578 = vmatpush1.msra.mxu0 0.0
    %579 = vmatprep.subr.mxu0 0.0
    %580 = vmatpush1.msra.mxu0 0.0
    %581 = vmatprep.subr.mxu0 0.0
    %582 = vmatpush1.msra.mxu0 0.0
    %583 = vmatprep.subr.mxu0 0.0
    %584 = vmatpush1.msra.mxu0 0.0
    %585 = vmatprep.subr.mxu0 0.0
    %586 = vmatpush1.msra.mxu0 0.0
    %587 = vmatprep.subr.mxu0 0.0
    %588 = vmatpush1.msra.mxu0 0.0
    %589 = vmatprep.subr.mxu0 0.0
    %590 = vmatpush1.msra.mxu0 0.0
    %591 = vmatprep.subr.mxu0 0.0
    %592 = vmatpush1.msra.mxu0 0.0
    %593 = vmatprep.subr.mxu0 0.0
    %594 = vmatpush1.msra.mxu0 0.0
    %595 = vmatprep.subr.mxu0 0.0
    %596 = vmatpush1.msra.mxu0 0.0
    %597 = vmatprep.subr.mxu0 0.0
    %598 = vmatpush1.msra.mxu0 0.0
    %599 = vmatprep.subr.mxu0 0.0
    %600 = vmatpush1.msra.mxu0 0.0
    %601 = vmatprep.subr.mxu0 0.0
    %602 = vmatpush1.msra.mxu0 0.0
    %603 = vmatprep.subr.mxu0 0.0
    %604 = vmatpush1.msra.mxu0 0.0
    %605 = vmatprep.subr.mxu0 0.0
    %606 = vmatpush1.msra.mxu0 0.0
    %607 = vmatprep.subr.mxu0 0.0
    %608 = vmatpush1.msra.mxu0 0.0
    %609 = vmatprep.subr.mxu0 0.0
    %610 = vmatpush1.msra.mxu0 0.0
    %611 = vmatprep.subr.mxu0 0.0
    %612 = vmatpush1.msra.mxu0 0.0
    %613 = vmatprep.subr.mxu0 0.0
    %614 = vmatpush1.msra.mxu0 0.0
    %615 = vmatprep.subr.mxu0 0.0
    %616 = vmatpush1.msra.mxu0 0.0
    %617 = vmatprep.subr.mxu0 0.0
    %618 = vmatpush1.msra.mxu0 0.0
    %619 = vmatprep.subr.mxu0 0.0
    %620 = vmatpush1.msra.mxu0 0.0
    %621 = vmatprep.subr.mxu0 0.0
    %622 = vmatpush1.msra.mxu0 0.0
    %623 = vmatprep.subr.mxu0 0.0
    %624 = vmatpush1.msra.mxu0 0.0
    %625 = vmatprep.subr.mxu0 0.0
    %626 = vmatpush1.msra.mxu0 0.0
    %627 = vmatprep.mubr.f32.mxu0 0.0
    %628 = vmatmul.mubr.f32.gmra.mrb[0].mxu0 %v561
    %v629 = vpop.f32.mrb[0].mxu0
    %v630 = vadd.f32 0.0, %v629
    %v631 = vpop.f32.mrb[0].mxu0
    %632 = vdwg.mxu0
    %v633 = vadd.f32 %v559, %v630
    %v634 = vtanh.pop %v633
    %s635 = sld [smem:[#allocation2 + $0x380]]
    %s636 = scalar_lea.vmem %s1, %s635
    %v637 = vld [vmem:[%s636] sm:$0x1]
    %s638 = sld [smem:[#allocation2 + $0x381]]
    %s639 = scalar_lea.vmem %s1, %s638
    %v640 = vld [vmem:[%s639] sm:$0x1]
    %v642 = vrot.slane %v640, 7
    %v644 = vsel %vm43, %v637, %v642
    %v646 = vsel %vm49, %v634, 0
    %648 = vmatprep.subr.mxu0 0.0
    %649 = vmatpush1.msra.mxu0 %v45
    %650 = vmatprep.subr.mxu0 0.0
    %651 = vmatpush1.msra.mxu0 %v46
    %652 = vmatprep.subr.mxu0 0.0
    %653 = vmatpush1.msra.mxu0 %v47
    %654 = vmatprep.subr.mxu0 0.0
    %655 = vmatpush1.msra.mxu0 %v48
    %656 = vmatprep.subr.mxu0 0.0
    %657 = vmatpush1.msra.mxu0 0.0
    %658 = vmatprep.subr.mxu0 0.0
    %659 = vmatpush1.msra.mxu0 0.0
    %660 = vmatprep.subr.mxu0 0.0
    %661 = vmatpush1.msra.mxu0 0.0
    %662 = vmatprep.subr.mxu0 0.0
    %663 = vmatpush1.msra.mxu0 0.0
    %664 = vmatprep.subr.mxu0 0.0
    %665 = vmatpush1.msra.mxu0 0.0
    %666 = vmatprep.subr.mxu0 0.0
    %667 = vmatpush1.msra.mxu0 0.0
    %668 = vmatprep.subr.mxu0 0.0
    %669 = vmatpush1.msra.mxu0 0.0
    %670 = vmatprep.subr.mxu0 0.0
    %671 = vmatpush1.msra.mxu0 0.0
    %672 = vmatprep.subr.mxu0 0.0
    %673 = vmatpush1.msra.mxu0 0.0
    %674 = vmatprep.subr.mxu0 0.0
    %675 = vmatpush1.msra.mxu0 0.0
    %676 = vmatprep.subr.mxu0 0.0
    %677 = vmatpush1.msra.mxu0 0.0
    %678 = vmatprep.subr.mxu0 0.0
    %679 = vmatpush1.msra.mxu0 0.0
    %680 = vmatprep.subr.mxu0 0.0
    %681 = vmatpush1.msra.mxu0 0.0
    %682 = vmatprep.subr.mxu0 0.0
    %683 = vmatpush1.msra.mxu0 0.0
    %684 = vmatprep.subr.mxu0 0.0
    %685 = vmatpush1.msra.mxu0 0.0
    %686 = vmatprep.subr.mxu0 0.0
    %687 = vmatpush1.msra.mxu0 0.0
    %688 = vmatprep.subr.mxu0 0.0
    %689 = vmatpush1.msra.mxu0 0.0
    %690 = vmatprep.subr.mxu0 0.0
    %691 = vmatpush1.msra.mxu0 0.0
    %692 = vmatprep.subr.mxu0 0.0
    %693 = vmatpush1.msra.mxu0 0.0
    %694 = vmatprep.subr.mxu0 0.0
    %695 = vmatpush1.msra.mxu0 0.0
    %696 = vmatprep.subr.mxu0 0.0
    %697 = vmatpush1.msra.mxu0 0.0
    %698 = vmatprep.subr.mxu0 0.0
    %699 = vmatpush1.msra.mxu0 0.0
    %700 = vmatprep.subr.mxu0 0.0
    %701 = vmatpush1.msra.mxu0 0.0
    %702 = vmatprep.subr.mxu0 0.0
    %703 = vmatpush1.msra.mxu0 0.0
    %704 = vmatprep.subr.mxu0 0.0
    %705 = vmatpush1.msra.mxu0 0.0
    %706 = vmatprep.subr.mxu0 0.0
    %707 = vmatpush1.msra.mxu0 0.0
    %708 = vmatprep.subr.mxu0 0.0
    %709 = vmatpush1.msra.mxu0 0.0
    %710 = vmatprep.subr.mxu0 0.0
    %711 = vmatpush1.msra.mxu0 0.0
    %712 = vmatprep.mubr.f32.mxu0 0.0
    %713 = vmatmul.mubr.f32.gmra.mrb[0].mxu0 %v646
    %v714 = vpop.f32.mrb[0].mxu0
    %v715 = vadd.f32 0.0, %v714
    %v716 = vpop.f32.mrb[0].mxu0
    %717 = vdwg.mxu0
    %v718 = vadd.f32 %v644, %v715
    %v719 = vtanh.pop %v718
    %v720 = vld [vmem:[%s3] sm:$0xff]
    %v721 = vld [vmem:[%s3 + $0x8] sm:$0xff]
    %v722 = vld [vmem:[%s3 + $0x10] sm:$0xff]
    %v723 = vld [vmem:[%s3 + $0x18] sm:$0xff]
    %v724 = vld [vmem:[%s4] sm:$0x1]
    %v726 = vlaneseq
    %v727 = vshrl.u32 %v726, 7
    %v728 = vsub.s32 0, %v727
    %v729 = vrot.slane %v724, %v728
    %v732 = vsel %vm49, %v719, 0
    %734 = vmatprep.subr.mxu0 0.0
    %735 = vmatpush1.msra.mxu0 %v720
    %736 = vmatprep.subr.mxu0 0.0
    %737 = vmatpush1.msra.mxu0 %v721
    %738 = vmatprep.subr.mxu0 0.0
    %739 = vmatpush1.msra.mxu0 %v722
    %740 = vmatprep.subr.mxu0 0.0
    %741 = vmatpush1.msra.mxu0 %v723
    %742 = vmatprep.subr.mxu0 0.0
    %743 = vmatpush1.msra.mxu0 0.0
    %744 = vmatprep.subr.mxu0 0.0
    %745 = vmatpush1.msra.mxu0 0.0
    %746 = vmatprep.subr.mxu0 0.0
    %747 = vmatpush1.msra.mxu0 0.0
    %748 = vmatprep.subr.mxu0 0.0
    %749 = vmatpush1.msra.mxu0 0.0
    %750 = vmatprep.subr.mxu0 0.0
    %751 = vmatpush1.msra.mxu0 0.0
    %752 = vmatprep.subr.mxu0 0.0
    %753 = vmatpush1.msra.mxu0 0.0
    %754 = vmatprep.subr.mxu0 0.0
    %755 = vmatpush1.msra.mxu0 0.0
    %756 = vmatprep.subr.mxu0 0.0
    %757 = vmatpush1.msra.mxu0 0.0
    %758 = vmatprep.subr.mxu0 0.0
    %759 = vmatpush1.msra.mxu0 0.0
    %760 = vmatprep.subr.mxu0 0.0
    %761 = vmatpush1.msra.mxu0 0.0
    %762 = vmatprep.subr.mxu0 0.0
    %763 = vmatpush1.msra.mxu0 0.0
    %764 = vmatprep.subr.mxu0 0.0
    %765 = vmatpush1.msra.mxu0 0.0
    %766 = vmatprep.subr.mxu0 0.0
    %767 = vmatpush1.msra.mxu0 0.0
    %768 = vmatprep.subr.mxu0 0.0
    %769 = vmatpush1.msra.mxu0 0.0
    %770 = vmatprep.subr.mxu0 0.0
    %771 = vmatpush1.msra.mxu0 0.0
    %772 = vmatprep.subr.mxu0 0.0
    %773 = vmatpush1.msra.mxu0 0.0
    %774 = vmatprep.subr.mxu0 0.0
    %775 = vmatpush1.msra.mxu0 0.0
    %776 = vmatprep.subr.mxu0 0.0
    %777 = vmatpush1.msra.mxu0 0.0
    %778 = vmatprep.subr.mxu0 0.0
    %779 = vmatpush1.msra.mxu0 0.0
    %780 = vmatprep.subr.mxu0 0.0
    %781 = vmatpush1.msra.mxu0 0.0
    %782 = vmatprep.subr.mxu0 0.0
    %783 = vmatpush1.msra.mxu0 0.0
    %784 = vmatprep.subr.mxu0 0.0
    %785 = vmatpush1.msra.mxu0 0.0
    %786 = vmatprep.subr.mxu0 0.0
    %787 = vmatpush1.msra.mxu0 0.0
    %788 = vmatprep.subr.mxu0 0.0
    %789 = vmatpush1.msra.mxu0 0.0
    %790 = vmatprep.subr.mxu0 0.0
    %791 = vmatpush1.msra.mxu0 0.0
    %792 = vmatprep.subr.mxu0 0.0
    %793 = vmatpush1.msra.mxu0 0.0
    %794 = vmatprep.subr.mxu0 0.0
    %795 = vmatpush1.msra.mxu0 0.0
    %796 = vmatprep.subr.mxu0 0.0
    %797 = vmatpush1.msra.mxu0 0.0
    %798 = vmatprep.mubr.f32.mxu0 0.0
    %799 = vmatmul.mubr.f32.gmra.mrb[0].mxu0 %v732
    %v800 = vpop.f32.mrb[0].mxu0
    %v801 = vadd.f32 %v729, %v800
    %v802 = vpop.f32.mrb[0].mxu0
    %803 = vdwg.mxu0
    %804 = vst [vmem:[#allocation5] sm:$0x3] %v801
    // Predicated region
    $region26: #{tpu_custom_call.1} parent=1 // pred_check
      _
    $region27: #{tpu_custom_call.1} parent=1 // pred_check_branch
      %806 = sbr.rel (0) target = $region29
    $region28: #{tpu_custom_call.1} parent=1 // pred_region
      %s808 = ssub.s32 32, 32
      %809 = vsyncadd [#allocation3], %s808
      %s811 = sshll.u32 [#allocation5], 4
      %s812 = int_to_ptr.vmem [resolvable:$true] %s811
      %814 = dma.vmem_to_hbm [thread:$0]  %s812, 32, %s5, [#allocation3]
    $region29: #{tpu_custom_call.1} parent=1 // pred_fallthru
      _
    // Predicated region
    $region30: #{tpu_custom_call.1} parent=1 // pred_check
      _
    $region31: #{tpu_custom_call.1} parent=1 // pred_check_branch
      %816 = sbr.rel (0) target = $region33
    $region32: #{tpu_custom_call.1} parent=1 // pred_region
      %817 = dma.done [#allocation3], 32
    $region33: #{tpu_custom_call.1} parent=1 // pred_fallthru
      _
    %818 = vsyncpa [#allocation3], 1
    %819 = vsyncpa [#allocation4], 1

</llo_original>
